<compile_context>
chip_gen: v5e
topology: v5e:2x2
jax: 0.10.0
libtpu: 0.0.40
codegen_flags: <defaults>
</compile_context>

<pallas_src>
import functools
import math

import jax
import jax.numpy as jnp
from jax import lax
from jax.experimental import pallas as pl
from jax.experimental.pallas import tpu as pltpu


# ----------------------------------------------------------------------------
# Kernel 1: tiled dense / linear layer   y = x @ W^T + b
#   x: (M, K)   w: (N, K)  (PyTorch (out, in) convention)   b: (N,)   y: (M, N)
# ----------------------------------------------------------------------------
def _linear_kernel(x_ref, w_ref, b_ref, o_ref, acc_ref):
    @pl.when(pl.program_id(2) == 0)
    def _():
        acc_ref[...] = jnp.zeros_like(acc_ref)

    # NT contraction: (tm, tk) . (tn, tk) -> (tm, tn).  The MXU consumes W in
    # (out, in) orientation directly -- no host-side w.T HBM pass.
    acc_ref[...] += lax.dot_general(
        x_ref[...], w_ref[...],
        dimension_numbers=(((1,), (1,)), ((), ())),
        preferred_element_type=jnp.float32)

    @pl.when(pl.program_id(2) == pl.num_programs(2) - 1)
    def _():
        o_ref[...] = (acc_ref[...] + b_ref[...]).astype(o_ref.dtype)


def _pick_tile(dim, target):
    """Largest clean tile: full dim if small, `target` if it divides, else full."""
    if dim <= target:
        return dim
    if dim % target == 0:
        return target
    return dim


def linear(x, w, b, *, tm_target=256, tn_target=256, tk_target=256):
    """x: (M, K); w: (N, K) PyTorch convention; b: (N,) -> (M, N)."""
    m, k = x.shape
    n = w.shape[0]
    tm = _pick_tile(m, tm_target)
    tn = _pick_tile(n, tn_target)
    tk = _pick_tile(k, tk_target)
    b2 = b.reshape(1, n)
    return pl.pallas_call(
        _linear_kernel,
        out_shape=jax.ShapeDtypeStruct((m, n), x.dtype),
        grid_spec=pltpu.PrefetchScalarGridSpec(
            num_scalar_prefetch=0,
            grid=(m // tm, n // tn, k // tk),
            in_specs=[
                pl.BlockSpec((tm, tk), lambda i, j, kk: (i, kk)),
                pl.BlockSpec((tn, tk), lambda i, j, kk: (j, kk)),
                pl.BlockSpec((1, tn), lambda i, j, kk: (0, j)),
            ],
            out_specs=pl.BlockSpec((tm, tn), lambda i, j, kk: (i, j)),
            scratch_shapes=[pltpu.VMEM((tm, tn), jnp.float32)],
        ),
        compiler_params=pltpu.CompilerParams(
            dimension_semantics=("parallel", "parallel", "arbitrary"),
            vmem_limit_bytes=64 * 1024 * 1024),
    )(x, w, b2)


# ----------------------------------------------------------------------------
# Kernel 2: scaled dot-product attention, one batch element per grid step,
# all heads processed inside the step.  q/k/v/out stay in (B, S, H) layout;
# the head axis is a static lane slice of the (S, H) tile.
# ----------------------------------------------------------------------------
def _attn_kernel(q_ref, k_ref, v_ref, o_ref, *, num_heads, head_dim, scale):
    for h in range(num_heads):                       # static unroll over heads
        sl = slice(h * head_dim, (h + 1) * head_dim)
        qh = q_ref[:, sl] * scale                    # fold 1/sqrt(hd) into q
        kh = k_ref[:, sl]
        vh = v_ref[:, sl]
        # QK^T as an NT matmul: no explicit transpose of K.
        s = lax.dot_general(qh, kh,
                            dimension_numbers=(((1,), (1,)), ((), ())),
                            preferred_element_type=jnp.float32)   # (S, S) f32
        m = jnp.max(s, axis=-1, keepdims=True)
        p = jnp.exp(s - m)
        l = jnp.sum(p, axis=-1, keepdims=True)
        ctx = lax.dot_general(p.astype(vh.dtype), vh,
                              dimension_numbers=(((1,), (0,)), ((), ())),
                              preferred_element_type=jnp.float32)  # (S, hd)
        # Normalize after the PV matmul: S*hd divides instead of S*S.
        o_ref[:, sl] = (ctx / l).astype(o_ref.dtype)
        # TODO(synk): training-mode attention dropout not implemented (eval no-op).


def attention(q, k, v, num_heads):
    """q/k/v: (B, S, H) -> context (B, S, H); no host split/merge transposes."""
    b, s, h = q.shape
    hd = h // num_heads
    kernel = functools.partial(_attn_kernel, num_heads=num_heads,
                               head_dim=hd, scale=1.0 / math.sqrt(hd))
    blk = pl.BlockSpec((None, s, h), lambda bi: (bi, 0, 0))   # kernel sees (S, H)
    return pl.pallas_call(
        kernel,
        out_shape=jax.ShapeDtypeStruct((b, s, h), q.dtype),
        grid_spec=pltpu.PrefetchScalarGridSpec(
            num_scalar_prefetch=0,
            grid=(b,),
            in_specs=[blk, blk, blk],
            out_specs=blk,
        ),
        compiler_params=pltpu.CompilerParams(
            dimension_semantics=("parallel",),
            vmem_limit_bytes=64 * 1024 * 1024),
    )(q, k, v)


# ----------------------------------------------------------------------------
# Full MultiAttention forward
# ----------------------------------------------------------------------------
def multi_attention_forward(params, q, k, v, num_heads):
    b, s, h = q.shape

    def proj(x, name):
        y = linear(x.reshape(b * s, h), params[f"{name}_w"], params[f"{name}_b"])
        return y.reshape(b, s, h)

    mq = proj(q, "query")
    mk = proj(k, "key")
    mv = proj(v, "value")

    ctx = attention(mq, mk, mv, num_heads)           # (B, S, H), already merged

    out = linear(ctx.reshape(b * s, h), params["out_w"], params["out_b"])
    return out.reshape(b, s, h)


def init_params(key, hidden_size):
    ks = jax.random.split(key, 8)
    bound = 1.0 / math.sqrt(hidden_size)

    def lin(kw, kb):
        w = jax.random.uniform(kw, (hidden_size, hidden_size),
                               jnp.float32, -bound, bound)
        bb = jax.random.uniform(kb, (hidden_size,), jnp.float32, -bound, bound)
        return w, bb

    p = {}
    for i, name in enumerate(["query", "key", "value", "out"]):
        w, bb = lin(ks[2 * i], ks[2 * i + 1])
        p[f"{name}_w"] = w        # PyTorch (out, in) orientation, never transposed
        p[f"{name}_b"] = bb
    return p


if __name__ == "__main__":
    B, S, H, NH = 2, 8, 32, 4          # hidden=32, heads=4 -> head_dim=8
    key = jax.random.PRNGKey(0)
    kp, kq, kk, kv = jax.random.split(key, 4)

    params = init_params(kp, H)
    q = jax.random.normal(kq, (B, S, H), jnp.float32)
    k = jax.random.normal(kk, (B, S, H), jnp.float32)
    v = jax.random.normal(kv, (B, S, H), jnp.float32)

    out = multi_attention_forward(params, q, k, v, NH)
    jax.block_until_ready(out)

    # Pure-JAX reference check
    def ref_forward(params, q, k, v):
        def lin(x, w, b):
            return x @ w.T + b
        b_, s_, h_ = q.shape
        hd = h_ // NH

        def split(x):
            return x.reshape(b_, s_, NH, hd).transpose(0, 2, 1, 3)

        ql = split(lin(q, params["query_w"], params["query_b"]))
        kl = split(lin(k, params["key_w"], params["key_b"]))
        vl = split(lin(v, params["value_w"], params["value_b"]))
        sc = jnp.einsum("bhqd,bhkd->bhqk", ql, kl) / math.sqrt(hd)
        pr = jax.nn.softmax(sc, axis=-1)
        ctx = jnp.einsum("bhqk,bhkd->bhqd", pr, vl)
        ctx = ctx.transpose(0, 2, 1, 3).reshape(b_, s_, h_)
        return lin(ctx, params["out_w"], params["out_b"])

    ref = ref_forward(params, q, k, v)
    assert jnp.allclose(out, ref, atol=1e-4, rtol=1e-4), "mismatch vs reference"
    print("KERNEL_OK")
</pallas_src>

<mosaic_0001>
module attributes {stable_mosaic.version = 11 : i64} {
  func.func @_linear_kernel(%arg0: i32, %arg1: i32, %arg2: i32, %arg3: memref<16x32xf32, #tpu.memory_space<vmem>>, %arg4: memref<32x32xf32, #tpu.memory_space<vmem>>, %arg5: memref<1x32xf32, #tpu.memory_space<vmem>>, %arg6: memref<16x32xf32, #tpu.memory_space<vmem>>, %arg7: memref<16x32xf32, #tpu.memory_space<vmem>>) attributes {dimension_semantics = [#tpu.dimension_semantics<parallel>, #tpu.dimension_semantics<parallel>, #tpu.dimension_semantics<arbitrary>], iteration_bounds = array<i64: 1, 1, 1>, scalar_prefetch = 0 : i64, scratch_operands = 1 : i64, tpu.core_type = #tpu.core_type<tc>, window_params = [{transform_indices = @transform_0, window_bounds = array<i64: 16, 32>}, {transform_indices = @transform_1, window_bounds = array<i64: 32, 32>}, {transform_indices = @transform_2, window_bounds = array<i64: 1, 32>}, {transform_indices = @transform_3, window_bounds = array<i64: 16, 32>}]} {
    %c0_i32 = arith.constant 0 : i32
    %0 = arith.cmpi eq, %arg2, %c0_i32 : i32
    %1 = arith.extui %0 : i1 to i32
    %c0_i32_0 = arith.constant 0 : i32
    %2 = arith.cmpi ne, %1, %c0_i32_0 : i32
    scf.if %2 {
      %cst_10 = arith.constant 0.000000e+00 : f32
      %12 = vector.broadcast %cst_10 : f32 to vector<16x32xf32>
      %c0_11 = arith.constant 0 : index
      %c0_12 = arith.constant 0 : index
      %13 = vector.load %arg7[%c0_11, %c0_12] : memref<16x32xf32, #tpu.memory_space<vmem>>, vector<16x32xf32>
      tpu.vector_store %arg7[%c0_11, %c0_12], %12 {strides = array<i32>} : memref<16x32xf32, #tpu.memory_space<vmem>>, vector<16x32xf32>,
    } else {
    }
    %c0 = arith.constant 0 : index
    %c0_1 = arith.constant 0 : index
    %3 = vector.load %arg7[%c0, %c0_1] : memref<16x32xf32, #tpu.memory_space<vmem>>, vector<16x32xf32>
    %c0_2 = arith.constant 0 : index
    %c0_3 = arith.constant 0 : index
    %4 = vector.load %arg3[%c0_2, %c0_3] : memref<16x32xf32, #tpu.memory_space<vmem>>, vector<16x32xf32>
    %c0_4 = arith.constant 0 : index
    %c0_5 = arith.constant 0 : index
    %5 = vector.load %arg4[%c0_4, %c0_5] : memref<32x32xf32, #tpu.memory_space<vmem>>, vector<32x32xf32>
    %cst = arith.constant dense<0.000000e+00> : vector<16x32xf32>
    %6 = tpu.matmul %4, %5, %cst {dimension_numbers = #tpu.dot_dimension_numbers<[1], [1], [0], [0], [0, 0, 1, 0], [], []>} : vector<16x32xf32>, vector<32x32xf32>, vector<16x32xf32> -> vector<16x32xf32>
    %7 = arith.addf %3, %6 : vector<16x32xf32>
    %c0_6 = arith.constant 0 : index
    %c0_7 = arith.constant 0 : index
    %8 = vector.load %arg7[%c0_6, %c0_7] : memref<16x32xf32, #tpu.memory_space<vmem>>, vector<16x32xf32>
    tpu.vector_store %arg7[%c0_6, %c0_7], %7 {strides = array<i32>} : memref<16x32xf32, #tpu.memory_space<vmem>>, vector<16x32xf32>,
    %c0_i32_8 = arith.constant 0 : i32
    %9 = arith.cmpi eq, %arg2, %c0_i32_8 : i32
    %10 = arith.extui %9 : i1 to i32
    %c0_i32_9 = arith.constant 0 : i32
    %11 = arith.cmpi ne, %10, %c0_i32_9 : i32
    scf.if %11 {
      %c0_10 = arith.constant 0 : index
      %c0_11 = arith.constant 0 : index
      %12 = vector.load %arg7[%c0_10, %c0_11] : memref<16x32xf32, #tpu.memory_space<vmem>>, vector<16x32xf32>
      %c0_12 = arith.constant 0 : index
      %c0_13 = arith.constant 0 : index
      %13 = vector.load %arg5[%c0_12, %c0_13] : memref<1x32xf32, #tpu.memory_space<vmem>>, vector<1x32xf32>
      %14 = vector.broadcast %13 : vector<1x32xf32> to vector<16x32xf32>
      %15 = arith.addf %12, %14 : vector<16x32xf32>
      %c0_14 = arith.constant 0 : index
      %c0_15 = arith.constant 0 : index
      %16 = vector.load %arg6[%c0_14, %c0_15] : memref<16x32xf32, #tpu.memory_space<vmem>>, vector<16x32xf32>
      tpu.vector_store %arg6[%c0_14, %c0_15], %15 {strides = array<i32>} : memref<16x32xf32, #tpu.memory_space<vmem>>, vector<16x32xf32>,
    } else {
    }
    return
  }
  func.func @transform_0(%arg0: i32, %arg1: i32, %arg2: i32) -> (i32, i32) {
    %c0_i32 = arith.constant 0 : i32
    return %arg0, %arg2 : i32, i32
  }
  func.func @transform_1(%arg0: i32, %arg1: i32, %arg2: i32) -> (i32, i32) {
    %c0_i32 = arith.constant 0 : i32
    return %arg1, %arg2 : i32, i32
  }
  func.func @transform_2(%arg0: i32, %arg1: i32, %arg2: i32) -> (i32, i32) {
    %c0_i32 = arith.constant 0 : i32
    %c0_i32_0 = arith.constant 0 : i32
    return %c0_i32, %arg1 : i32, i32
  }
  func.func @transform_3(%arg0: i32, %arg1: i32, %arg2: i32) -> (i32, i32) {
    %c0_i32 = arith.constant 0 : i32
    return %arg0, %arg1 : i32, i32
  }
}

</mosaic_0001>

<llo_original>
// kernel: tpu_custom_call.1
$region0: #{tpu_custom_call.1}
  #allocation0 [shape = 'u32[]', space=smem, size = 0x4, offset = 0x4, fixed_abs, tag = 'smem constant byte address 0x4 - core index']
  #allocation1 [shape = 'u32[72,128]{1,0:T(1,128)}', space=vmem, size = 0x9000, scoped, tag = 'internal scratch']
  #allocation2 [shape = 'f32[16,32]{1,0:T(8,128)}', space=vmem, size = 0x2000, scoped, tag = 'scratch operand']
  %s0 = inlined_call_operand.hbm [shape: f32[16,32], index: 0, kind: input, shape index: {}]
  %s1 = inlined_call_operand.hbm [shape: f32[32,32], index: 1, kind: input, shape index: {}]
  %s2 = inlined_call_operand.vmem [shape: f32[1,32], index: 2, kind: input, shape index: {}]
  %s3 = inlined_call_operand.hbm [shape: f32[16,32], index: 3, kind: output, shape index: {}]
  %s4 = sld [smem:[#allocation0]]
  $region38: #{tpu_custom_call.1} parent=0
    _
  %s6 = ssub.s32 1, %s4
  %s7 = scalar_select 0, %s6, %s4
  $region1: #{tpu_custom_call.1} parent=0
    #allocation3 [shape = 'u8[8192]{0}', space=vmem, size = 0x2000, scoped, tag = 'input window, operand 0, single buffered']
    #allocation4 [shape = 's32[1]{0}', space=sflag, size = 0x4, scoped, tag = 'scoped memory for tpu_custom_call.1']
    #allocation5 [shape = 's32[1]{0}', space=sflag, size = 0x4, scoped, tag = 'scoped memory for tpu_custom_call.1']
    #allocation6 [shape = 'u8[16384]{0}', space=vmem, size = 0x4000, scoped, tag = 'input window, operand 1, single buffered']
    #allocation7 [shape = 's32[1]{0}', space=sflag, size = 0x4, scoped, tag = 'scoped memory for tpu_custom_call.1']
    #allocation8 [shape = 'u8[8192]{0}', space=vmem, size = 0x2000, scoped, tag = 'output window, operand 0, single buffered']
    %8 = vsyncpa [#allocation4], 0
    %9 = vsyncpa [#allocation7], 0
    %10 = vsyncpa [#allocation5], 0
    // Predicated region
    $region2: #{tpu_custom_call.1} parent=1 // pred_check
      _
    $region3: #{tpu_custom_call.1} parent=1 // pred_check_branch
      %12 = sbr.rel (0) target = $region5
    $region4: #{tpu_custom_call.1} parent=1 // pred_region
      %14 = vsyncadd [#allocation4], 0
      %s15 = sshll.u32 %s0, 4
      %s16 = int_to_ptr.hbm [resolvable:$true] %s15
      %s17 = sshll.u32 [#allocation3], 4
      %s18 = int_to_ptr.vmem [resolvable:$true] %s17
      %23 = dma.hbm_to_vmem [thread:$0]  %s16, 256, %s18, [#allocation4], 128, 128, 8
    $region5: #{tpu_custom_call.1} parent=1 // pred_fallthru
      _
    // Predicated region
    $region6: #{tpu_custom_call.1} parent=1 // pred_check
      _
    $region7: #{tpu_custom_call.1} parent=1 // pred_check_branch
      %25 = sbr.rel (0) target = $region9
    $region8: #{tpu_custom_call.1} parent=1 // pred_region
      %27 = vsyncadd [#allocation7], 0
      %s28 = sshll.u32 %s1, 4
      %s29 = int_to_ptr.hbm [resolvable:$true] %s28
      %s30 = sshll.u32 [#allocation6], 4
      %s31 = int_to_ptr.vmem [resolvable:$true] %s30
      %36 = dma.hbm_to_vmem [thread:$0]  %s29, 512, %s31, [#allocation7], 128, 128, 8
    $region9: #{tpu_custom_call.1} parent=1 // pred_fallthru
      _
    // Predicated region
    $region10: #{tpu_custom_call.1} parent=1 // pred_check
      _
    $region11: #{tpu_custom_call.1} parent=1 // pred_check_branch
      %38 = sbr.rel (0) target = $region13
    $region12: #{tpu_custom_call.1} parent=1 // pred_region
      _
    $region13: #{tpu_custom_call.1} parent=1 // pred_fallthru
      _
    // Predicated region
    $region14: #{tpu_custom_call.1} parent=1 // pred_check
      _
    $region15: #{tpu_custom_call.1} parent=1 // pred_check_branch
      %40 = sbr.rel (0) target = $region17
    $region16: #{tpu_custom_call.1} parent=1 // pred_region
      %42 = dma.done [#allocation4], 256
    $region17: #{tpu_custom_call.1} parent=1 // pred_fallthru
      _
    // Predicated region
    $region18: #{tpu_custom_call.1} parent=1 // pred_check
      _
    $region19: #{tpu_custom_call.1} parent=1 // pred_check_branch
      %44 = sbr.rel (0) target = $region21
    $region20: #{tpu_custom_call.1} parent=1 // pred_region
      %46 = dma.done [#allocation7], 512
    $region21: #{tpu_custom_call.1} parent=1 // pred_fallthru
      _
    %p47 = scmp.eq.s32.totalorder 0, 0
    // Predicated region
    $region22: #{tpu_custom_call.1} parent=1 // pred_check
      %p48 = pneg %p47
    $region23: #{tpu_custom_call.1} parent=1 // pred_check_branch
      %50 = sbr.rel (%p48) target = $region25
    $region24: #{tpu_custom_call.1} parent=1 // pred_region
      %vm51 = vcmask 261120
      %52 = vst.msk [vmem:[#allocation2] sm:$0xff] %vm51, 0.0
      %53 = vst.msk [vmem:[#allocation2 + $0x8] sm:$0xff] %vm51, 0.0
    $region25: #{tpu_custom_call.1} parent=1 // pred_fallthru
      _
    %v54 = vld [vmem:[#allocation2] sm:$0xff]
    %v55 = vld [vmem:[#allocation2 + $0x8] sm:$0xff]
    %v56 = vld [vmem:[#allocation3] sm:$0xff]
    %v57 = vld [vmem:[#allocation3 + $0x8] sm:$0xff]
    %v58 = vld [vmem:[#allocation6] sm:$0xff]
    %v59 = vld [vmem:[#allocation6 + $0x8] sm:$0xff]
    %v60 = vld [vmem:[#allocation6 + $0x10] sm:$0xff]
    %v61 = vld [vmem:[#allocation6 + $0x18] sm:$0xff]
    %vm62 = vcmask 261120
    %v64 = vsel %vm62, %v56, 0
    %v67 = vsel %vm62, %v57, 0
    %v70 = vsel %vm62, %v58, 0
    %v73 = vsel %vm62, %v59, 0
    %v76 = vsel %vm62, %v60, 0
    %v79 = vsel %vm62, %v61, 0
    %81 = vmatpush.xpose.msra.mxu0 0.0
    %82 = vmatpush.xpose.msra.mxu0 0.0
    %83 = vmatpush.xpose.msra.mxu0 0.0
    %84 = vmatpush.xpose.msra.mxu0 0.0
    %85 = vmatpush.xpose.msra.mxu0 0.0
    %86 = vmatpush.xpose.msra.mxu0 0.0
    %87 = vmatpush.xpose.msra.mxu0 0.0
    %88 = vmatpush.xpose.msra.mxu0 0.0
    %89 = vmatpush.xpose.msra.mxu0 0.0
    %90 = vmatpush.xpose.msra.mxu0 0.0
    %91 = vmatpush.xpose.msra.mxu0 0.0
    %92 = vmatpush.xpose.msra.mxu0 0.0
    %93 = vmatpush.xpose.msra.mxu0 %v79
    %94 = vmatpush.xpose.msra.mxu0 %v76
    %95 = vmatpush.xpose.msra.mxu0 %v73
    %96 = vmatpush.xpose.msra.mxu0 %v70
    %97 = vmatmul.f32.gmra.mxu0 %v64
    %v98 = vpop.f32.mrf.mxu0
    %v99 = vadd.f32 0.0, %v98
    %100 = vmatmul.f32.gmra.mxu0 %v67
    %v101 = vpop.f32.mrf.mxu0
    %v102 = vadd.f32 0.0, %v101
    %103 = vdwg.mxu0
    %v104 = vadd.f32 %v54, %v99
    %v105 = vadd.f32 %v55, %v102
    %106 = vst.msk [vmem:[#allocation2] sm:$0xff] %vm62, %v104
    %107 = vst.msk [vmem:[#allocation2 + $0x8] sm:$0xff] %vm62, %v105
    // Predicated region
    $region26: #{tpu_custom_call.1} parent=1 // pred_check
      %p108 = pneg %p47
    $region27: #{tpu_custom_call.1} parent=1 // pred_check_branch
      %110 = sbr.rel (%p108) target = $region29
    $region28: #{tpu_custom_call.1} parent=1 // pred_region
      %v111 = vld [vmem:[#allocation2] sm:$0xff]
      %v112 = vld [vmem:[#allocation2 + $0x8] sm:$0xff]
      %v113 = vld [vmem:[%s2] sm:$0x1]
      %v115 = vperm.slane %v113, 0
      %v117 = vadd.f32 %v111, %v115
      %v118 = vadd.f32 %v112, %v115
      %119 = vst.msk [vmem:[#allocation8] sm:$0xff] %vm62, %v117
      %120 = vst.msk [vmem:[#allocation8 + $0x8] sm:$0xff] %vm62, %v118
    $region29: #{tpu_custom_call.1} parent=1 // pred_fallthru
      _
    // Predicated region
    $region30: #{tpu_custom_call.1} parent=1 // pred_check
      _
    $region31: #{tpu_custom_call.1} parent=1 // pred_check_branch
      %122 = sbr.rel (0) target = $region33
    $region32: #{tpu_custom_call.1} parent=1 // pred_region
      %124 = vsyncadd [#allocation5], 0
      %s125 = sshll.u32 [#allocation8], 4
      %s126 = int_to_ptr.vmem [resolvable:$true] %s125
      %s127 = sshll.u32 %s3, 4
      %s128 = int_to_ptr.hbm [resolvable:$true] %s127
      %133 = dma.vmem_to_hbm [thread:$0]  %s126, 256, %s128, [#allocation5], 128, 128, 8
    $region33: #{tpu_custom_call.1} parent=1 // pred_fallthru
      _
    // Predicated region
    $region34: #{tpu_custom_call.1} parent=1 // pred_check
      _
    $region35: #{tpu_custom_call.1} parent=1 // pred_check_branch
      %135 = sbr.rel (0) target = $region37
    $region36: #{tpu_custom_call.1} parent=1 // pred_region
      %137 = dma.done [#allocation5], 256
    $region37: #{tpu_custom_call.1} parent=1 // pred_fallthru
      _
    %138 = vsyncpa [#allocation4], 1
    %139 = vsyncpa [#allocation7], 1
    %140 = vsyncpa [#allocation5], 1

</llo_original>
